<compile_context>
chip_gen: v5e
topology: v5e:2x2
jax: 0.10.0
libtpu: 0.0.40
codegen_flags: <defaults>
</compile_context>

<pallas_src>
import functools
import math

import jax
import jax.numpy as jnp
from jax.experimental import pallas as pl
from jax.experimental.pallas import tpu as pltpu


def _round_up(x, m):
    return (x + m - 1) // m * m


def _vmem_limit_bytes():
    # v7x has only 64 MiB of VMEM per TensorCore; v5e/v6e have 128 MiB.
    try:
        kind = jax.devices()[0].device_kind.lower()
    except Exception:
        kind = ""
    if "v7" in kind:
        return 48 * 1024 * 1024
    return 96 * 1024 * 1024


def _splitmix32(z):
    z = (z ^ (z >> 16)) * jnp.uint32(0x7FEB352D)
    z = (z ^ (z >> 15)) * jnp.uint32(0x846CA68B)
    return z ^ (z >> 16)


def _epilogue(h, o_ref, b_ref, seed, i, j, *, use_bias, dropout, training,
              act, tm, tn):
    """bias + dropout + activation + cast + store (h is f32)."""
    if use_bias:
        h = h + b_ref[...].astype(jnp.float32)

    if training and dropout > 0.0:
        # Stateless counter-based hash PRNG (runs on TPU and the interpreter).
        # Rows/cols hashed as 1-wide vectors, then combined: ~3 VPU ops over
        # the full (tm, tn) tile instead of a 3-round hash of two int tiles.
        seed_u = seed.astype(jnp.uint32)
        rows = (jax.lax.broadcasted_iota(jnp.int32, (h.shape[0], 1), 0)
                .astype(jnp.uint32) + jnp.uint32(tm) * i.astype(jnp.uint32))
        cols = (jax.lax.broadcasted_iota(jnp.int32, (1, h.shape[1]), 1)
                .astype(jnp.uint32) + jnp.uint32(tn) * j.astype(jnp.uint32))
        rh = _splitmix32(rows + seed_u * jnp.uint32(0x9E3779B9))
        ch = _splitmix32(cols ^ (seed_u + jnp.uint32(0x85EBCA6B)))
        z = (rh ^ ch) * jnp.uint32(0x9E3779B9)
        z = z ^ (z >> 16)
        # keep with probability (1 - p): integer-only 31-bit compare.
        thresh = jnp.int32(min(int(round(dropout * 2147483648.0)), 2147483647))
        keep = (z & jnp.uint32(0x7FFFFFFF)).astype(jnp.int32) >= thresh
        h = jnp.where(keep, h * jnp.float32(1.0 / (1.0 - dropout)),
                      jnp.float32(0.0))

    # NOTE: act must be elementwise (padded rows/cols pass through it before
    # the final slice back to (n, out_features)).
    h = act(h)
    o_ref[...] = h.astype(o_ref.dtype)


def _linear_kernel(seed_ref, x_ref, w_ref, *rest, use_bias, single_k, dropout,
                   training, act, tm, tn, matmul_dtype):
    if use_bias:
        b_ref = rest[0]
        rest = rest[1:]
    else:
        b_ref = None
    o_ref = rest[0]
    acc_ref = None if single_k else rest[1]

    # All program_id / scalar-prefetch reads at the TOP LEVEL of the kernel
    # (never inside a pl.when body) -- required for the interpret fallback.
    i = pl.program_id(0)
    j = pl.program_id(1)
    seed = seed_ref[0]

    x = x_ref[...]
    w = w_ref[...]
    if matmul_dtype is not None:
        x = x.astype(matmul_dtype)
        w = w.astype(matmul_dtype)

    if single_k:
        # Single K step: no accumulator round-trip, write output directly.
        h = jnp.dot(x, w, preferred_element_type=jnp.float32)
        _epilogue(h, o_ref, b_ref, seed, i, j, use_bias=use_bias,
                  dropout=dropout, training=training, act=act, tm=tm, tn=tn)
    else:
        k = pl.program_id(2)
        nk = pl.num_programs(2)

        @pl.when(k == 0)
        def _():
            acc_ref[...] = jnp.zeros_like(acc_ref)

        acc_ref[...] += jnp.dot(x, w, preferred_element_type=jnp.float32)

        @pl.when(k == nk - 1)
        def _():
            _epilogue(acc_ref[...], o_ref, b_ref, seed, i, j,
                      use_bias=use_bias, dropout=dropout, training=training,
                      act=act, tm=tm, tn=tn)


def make_linear(weight, bias=None, *, dropout=0.0,
                act=lambda t: jnp.maximum(t, 0.0),
                tm_max=512, tn_max=512, tk_max=1024, matmul_dtype=None):
    """Build a Pallas forward fn: act(dropout(x @ W^T + b, p, training)).

    `weight` is torch-layout (out_features, in_features). It is transposed and
    padded once here (hoisted out of the per-call path) so the kernel runs a
    standard (tm,tk)x(tk,tn) contraction with no per-tile transposes.
    """
    assert 0.0 <= dropout < 1.0, "dropout must be in [0, 1)"
    out_f, in_f = weight.shape
    use_bias = bias is not None

    # Lane dims (K, out_features) multiples of 128; sublane (M) multiples of 8.
    tn = min(tn_max, _round_up(out_f, 128))
    tk = min(tk_max, _round_up(in_f, 128))
    op = _round_up(out_f, tn)
    kp = _round_up(in_f, tk)

    w_t = jnp.transpose(weight)                       # (in_f, out_f), once
    if (kp, op) != (in_f, out_f):
        w_t = jnp.pad(w_t, ((0, kp - in_f), (0, op - out_f)))
    params = [w_t]
    if use_bias:
        b_p = bias if op == out_f else jnp.pad(bias, (0, op - out_f))
        params.append(b_p.reshape(1, op))

    vmem_limit = _vmem_limit_bytes()

    def forward(x, *, training=False, seed=0):
        n, in_f2 = x.shape
        assert in_f2 == in_f, "x last dim must equal in_features"

        tm = min(tm_max, _round_up(n, 8))
        np_ = _round_up(n, tm)
        # v7x megacore: ensure >= 2 tiles on a parallel axis when M allows it.
        if np_ // tm == 1 and op // tn == 1 and np_ >= 16:
            tm = _round_up((np_ + 1) // 2, 8)
            np_ = _round_up(n, tm)

        x_p = x if (np_ == n and kp == in_f) else jnp.pad(
            x, ((0, np_ - n), (0, kp - in_f)))

        nk = kp // tk
        grid = (np_ // tm, op // tn, nk)
        single_k = nk == 1

        in_specs = [
            pl.BlockSpec((tm, tk), lambda i, j, k, s: (i, k)),   # x
            pl.BlockSpec((tk, tn), lambda i, j, k, s: (k, j)),   # W^T (pre-T)
        ]
        if use_bias:
            in_specs.append(pl.BlockSpec((1, tn), lambda i, j, k, s: (0, j)))

        kernel = functools.partial(
            _linear_kernel, use_bias=use_bias, single_k=single_k,
            dropout=float(dropout), training=bool(training), act=act,
            tm=tm, tn=tn, matmul_dtype=matmul_dtype)

        seed_arr = jnp.array([seed], dtype=jnp.int32)
        out_dtype = x.dtype
        elem = jnp.dtype(out_dtype).itemsize

        out_p = pl.pallas_call(
            kernel,
            out_shape=jax.ShapeDtypeStruct((np_, op), out_dtype),
            grid_spec=pltpu.PrefetchScalarGridSpec(
                num_scalar_prefetch=1,
                grid=grid,
                in_specs=in_specs,
                out_specs=pl.BlockSpec((tm, tn), lambda i, j, k, s: (i, j)),
                scratch_shapes=(
                    [] if single_k else [pltpu.VMEM((tm, tn), jnp.float32)]),
            ),
            compiler_params=pltpu.CompilerParams(
                dimension_semantics=("parallel", "parallel", "arbitrary"),
                vmem_limit_bytes=vmem_limit,
            ),
            cost_estimate=pl.CostEstimate(
                flops=2 * np_ * kp * op,
                transcendentals=0,
                bytes_accessed=(np_ * kp + kp * op + np_ * op
                                + (op if use_bias else 0)) * elem,
            ),
        )(seed_arr, x_p, *params)

        if (np_, op) != (n, out_f):
            out_p = out_p[:n, :out_f]
        return out_p

    return forward


if __name__ == "__main__":
    key = jax.random.PRNGKey(0)
    kx, kw, kb, kx2, kw2, kb2 = jax.random.split(key, 6)
    act = lambda t: jnp.maximum(t, 0.0)   # ReLU as self.act

    # ---- Test 1: D-HYPR-like small layer (single-K fast path) ----
    in_features, out_features, n = 32, 16, 8
    dropout_p = 0.1
    bound = 1.0 / math.sqrt(in_features)
    x = jax.random.normal(kx, (n, in_features), dtype=jnp.float32)
    weight = jax.random.uniform(kw, (out_features, in_features),
                                minval=-bound, maxval=bound, dtype=jnp.float32)
    bias = jax.random.uniform(kb, (out_features,),
                              minval=-bound, maxval=bound, dtype=jnp.float32)

    fwd = make_linear(weight, bias, dropout=dropout_p, act=act)

    out_eval = jax.block_until_ready(fwd(x, training=False))
    ref = act(x @ weight.T + bias[None, :])
    assert out_eval.shape == ref.shape
    assert jnp.allclose(out_eval, ref, atol=1e-5, rtol=1e-5), "eval mismatch"

    out_train = jax.block_until_ready(fwd(x, training=True, seed=123))
    assert out_train.shape == ref.shape
    assert bool(jnp.all(jnp.isfinite(out_train)))

    # ---- Test 2: multi-K accumulator path + multi-tile M (forced tk=128) ----
    n2, in2, out2 = 32, 320, 192
    bound2 = 1.0 / math.sqrt(in2)
    x2 = jax.random.normal(kx2, (n2, in2), dtype=jnp.float32)
    w2 = jax.random.uniform(kw2, (out2, in2),
                            minval=-bound2, maxval=bound2, dtype=jnp.float32)
    b2 = jax.random.uniform(kb2, (out2,),
                            minval=-bound2, maxval=bound2, dtype=jnp.float32)
    fwd2 = make_linear(w2, b2, dropout=0.0, act=act, tk_max=128)
    out2_eval = jax.block_until_ready(fwd2(x2, training=False))
    ref2 = act(x2 @ w2.T + b2[None, :])
    assert out2_eval.shape == ref2.shape
    assert jnp.allclose(out2_eval, ref2, atol=1e-4, rtol=1e-4), "multi-K mismatch"

    print("KERNEL_OK")
</pallas_src>

<mosaic_0001>
module attributes {stable_mosaic.version = 11 : i64} {
  func.func @_linear_kernel(%arg0: i32, %arg1: i32, %arg2: i32, %arg3: memref<1xi32, #tpu.memory_space<smem>>, %arg4: memref<8x128xf32, #tpu.memory_space<vmem>>, %arg5: memref<128x128xf32, #tpu.memory_space<vmem>>, %arg6: memref<1x128xf32, #tpu.memory_space<vmem>>, %arg7: memref<8x128xf32, #tpu.memory_space<vmem>>) attributes {dimension_semantics = [#tpu.dimension_semantics<parallel>, #tpu.dimension_semantics<parallel>, #tpu.dimension_semantics<arbitrary>], iteration_bounds = array<i64: 1, 1, 1>, scalar_prefetch = 1 : i64, scratch_operands = 0 : i64, tpu.core_type = #tpu.core_type<tc>, window_params = [{transform_indices = @transform_0, window_bounds = array<i64: 8, 128>}, {transform_indices = @transform_1, window_bounds = array<i64: 128, 128>}, {transform_indices = @transform_2, window_bounds = array<i64: 1, 128>}, {transform_indices = @transform_3, window_bounds = array<i64: 8, 128>}]} {
    %c0 = arith.constant 0 : index
    %c0_0 = arith.constant 0 : index
    %0 = vector.load %arg4[%c0, %c0_0] : memref<8x128xf32, #tpu.memory_space<vmem>>, vector<8x128xf32>
    %c0_1 = arith.constant 0 : index
    %c0_2 = arith.constant 0 : index
    %1 = vector.load %arg5[%c0_1, %c0_2] : memref<128x128xf32, #tpu.memory_space<vmem>>, vector<128x128xf32>
    %cst = arith.constant dense<0.000000e+00> : vector<8x128xf32>
    %2 = tpu.matmul %0, %1, %cst {dimension_numbers = #tpu.dot_dimension_numbers<[1], [0], [0], [1], [0, 0, 1, 1], [], []>} : vector<8x128xf32>, vector<128x128xf32>, vector<8x128xf32> -> vector<8x128xf32>
    %c0_3 = arith.constant 0 : index
    %c0_4 = arith.constant 0 : index
    %3 = vector.load %arg6[%c0_3, %c0_4] : memref<1x128xf32, #tpu.memory_space<vmem>>, vector<1x128xf32>
    %4 = vector.broadcast %3 : vector<1x128xf32> to vector<8x128xf32>
    %5 = arith.addf %2, %4 : vector<8x128xf32>
    %cst_5 = arith.constant 0.000000e+00 : f32
    %6 = vector.broadcast %cst_5 : f32 to vector<8x128xf32>
    %7 = arith.maximumf %5, %6 : vector<8x128xf32>
    %c0_6 = arith.constant 0 : index
    %c0_7 = arith.constant 0 : index
    %8 = vector.load %arg7[%c0_6, %c0_7] : memref<8x128xf32, #tpu.memory_space<vmem>>, vector<8x128xf32>
    tpu.vector_store %arg7[%c0_6, %c0_7], %7 {strides = array<i32>} : memref<8x128xf32, #tpu.memory_space<vmem>>, vector<8x128xf32>,
    return
  }
  func.func @transform_0(%arg0: i32, %arg1: i32, %arg2: i32, %arg3: memref<1xi32, #tpu.memory_space<smem>>) -> (i32, i32) {
    %c0_i32 = arith.constant 0 : i32
    return %arg0, %arg2 : i32, i32
  }
  func.func @transform_1(%arg0: i32, %arg1: i32, %arg2: i32, %arg3: memref<1xi32, #tpu.memory_space<smem>>) -> (i32, i32) {
    %c0_i32 = arith.constant 0 : i32
    return %arg2, %arg1 : i32, i32
  }
  func.func @transform_2(%arg0: i32, %arg1: i32, %arg2: i32, %arg3: memref<1xi32, #tpu.memory_space<smem>>) -> (i32, i32) {
    %c0_i32 = arith.constant 0 : i32
    %c0_i32_0 = arith.constant 0 : i32
    return %c0_i32, %arg1 : i32, i32
  }
  func.func @transform_3(%arg0: i32, %arg1: i32, %arg2: i32, %arg3: memref<1xi32, #tpu.memory_space<smem>>) -> (i32, i32) {
    %c0_i32 = arith.constant 0 : i32
    return %arg0, %arg1 : i32, i32
  }
}

</mosaic_0001>

<llo_original>
// kernel: tpu_custom_call.1
$region0: #{tpu_custom_call.1}
  #allocation0 [shape = 'u32[]', space=smem, size = 0x4, offset = 0x4, fixed_abs, tag = 'smem constant byte address 0x4 - core index']
  #allocation1 [shape = 'u32[72,128]{1,0:T(1,128)}', space=vmem, size = 0x9000, scoped, tag = 'internal scratch']
  #allocation2 [shape = 's32[1]{0}', space=sflag, size = 0x4, scoped, tag = 'scoped memory for tpu_custom_call.1']
  #allocation3 [shape = 's32[1]{0:T(128)S(6)}', space=smem, size = 0x200, scoped, tag = 'prefetched SMEM operand 0']
  %s0 = inlined_call_operand.<no memory space> [shape: s32[1], index: 0, kind: input, shape index: {}]
  %s1 = inlined_call_operand.hbm [shape: f32[8,128], index: 1, kind: input, shape index: {}]
  %s2 = inlined_call_operand.hbm [shape: f32[128,128], index: 2, kind: input, shape index: {}]
  %s3 = inlined_call_operand.vmem [shape: f32[1,128], index: 3, kind: input, shape index: {}]
  %s4 = inlined_call_operand.hbm [shape: f32[8,128], index: 4, kind: output, shape index: {}]
  %s5 = sld [smem:[#allocation0]]
  $region30: #{tpu_custom_call.1} parent=0
    _
  %s7 = ssub.s32 1, %s5
  %s8 = scalar_select 0, %s7, %s5
  %9 = sst [smem:[#allocation3]] %s0
  $region1: #{tpu_custom_call.1} parent=0
    #allocation4 [shape = 'u8[4096]{0}', space=vmem, size = 0x1000, scoped, tag = 'input window, operand 1, single buffered']
    #allocation5 [shape = 's32[1]{0}', space=sflag, size = 0x4, scoped, tag = 'scoped memory for tpu_custom_call.1']
    #allocation6 [shape = 's32[1]{0}', space=sflag, size = 0x4, scoped, tag = 'scoped memory for tpu_custom_call.1']
    #allocation7 [shape = 'u8[65536]{0}', space=vmem, size = 0x10000, scoped, tag = 'input window, operand 2, single buffered']
    #allocation8 [shape = 's32[1]{0}', space=sflag, size = 0x4, scoped, tag = 'scoped memory for tpu_custom_call.1']
    #allocation9 [shape = 'u8[4096]{0}', space=vmem, size = 0x1000, scoped, tag = 'output window, operand 0, single buffered']
    %10 = vsyncpa [#allocation5], 0
    %11 = vsyncpa [#allocation8], 0
    %12 = vsyncpa [#allocation6], 0
    // Predicated region
    $region2: #{tpu_custom_call.1} parent=1 // pred_check
      _
    $region3: #{tpu_custom_call.1} parent=1 // pred_check_branch
      %14 = sbr.rel (0) target = $region5
    $region4: #{tpu_custom_call.1} parent=1 // pred_region
      %16 = vsyncadd [#allocation5], 0
      %s18 = sshll.u32 %s1, 4
      %s19 = int_to_ptr.hbm [resolvable:$true] %s18
      %s20 = sshll.u32 [#allocation4], 4
      %s21 = int_to_ptr.vmem [resolvable:$true] %s20
      %23 = dma.hbm_to_vmem [thread:$0]  %s19, 128, %s21, [#allocation5]
    $region5: #{tpu_custom_call.1} parent=1 // pred_fallthru
      _
    // Predicated region
    $region6: #{tpu_custom_call.1} parent=1 // pred_check
      _
    $region7: #{tpu_custom_call.1} parent=1 // pred_check_branch
      %25 = sbr.rel (0) target = $region9
    $region8: #{tpu_custom_call.1} parent=1 // pred_region
      %27 = vsyncadd [#allocation8], 0
      %s28 = sshll.u32 %s2, 4
      %s29 = int_to_ptr.hbm [resolvable:$true] %s28
      %s30 = sshll.u32 [#allocation7], 4
      %s31 = int_to_ptr.vmem [resolvable:$true] %s30
      %36 = dma.hbm_to_vmem [thread:$0]  %s29, 2048, %s31, [#allocation8], 128, 128, 8
    $region9: #{tpu_custom_call.1} parent=1 // pred_fallthru
      _
    // Predicated region
    $region10: #{tpu_custom_call.1} parent=1 // pred_check
      _
    $region11: #{tpu_custom_call.1} parent=1 // pred_check_branch
      %38 = sbr.rel (0) target = $region13
    $region12: #{tpu_custom_call.1} parent=1 // pred_region
      _
    $region13: #{tpu_custom_call.1} parent=1 // pred_fallthru
      _
    // Predicated region
    $region14: #{tpu_custom_call.1} parent=1 // pred_check
      _
    $region15: #{tpu_custom_call.1} parent=1 // pred_check_branch
      %40 = sbr.rel (0) target = $region17
    $region16: #{tpu_custom_call.1} parent=1 // pred_region
      %42 = dma.done [#allocation5], 128
    $region17: #{tpu_custom_call.1} parent=1 // pred_fallthru
      _
    // Predicated region
    $region18: #{tpu_custom_call.1} parent=1 // pred_check
      _
    $region19: #{tpu_custom_call.1} parent=1 // pred_check_branch
      %44 = sbr.rel (0) target = $region21
    $region20: #{tpu_custom_call.1} parent=1 // pred_region
      %46 = dma.done [#allocation8], 2048
    $region21: #{tpu_custom_call.1} parent=1 // pred_fallthru
      _
    %v47 = vld [vmem:[#allocation4] sm:$0xff]
    %v48 = vld [vmem:[#allocation7] sm:$0xff]
    %v49 = vld [vmem:[#allocation7 + $0x8] sm:$0xff]
    %v50 = vld [vmem:[#allocation7 + $0x10] sm:$0xff]
    %v51 = vld [vmem:[#allocation7 + $0x18] sm:$0xff]
    %v52 = vld [vmem:[#allocation7 + $0x20] sm:$0xff]
    %v53 = vld [vmem:[#allocation7 + $0x28] sm:$0xff]
    %v54 = vld [vmem:[#allocation7 + $0x30] sm:$0xff]
    %v55 = vld [vmem:[#allocation7 + $0x38] sm:$0xff]
    %v56 = vld [vmem:[#allocation7 + $0x40] sm:$0xff]
    %v57 = vld [vmem:[#allocation7 + $0x48] sm:$0xff]
    %v58 = vld [vmem:[#allocation7 + $0x50] sm:$0xff]
    %v59 = vld [vmem:[#allocation7 + $0x58] sm:$0xff]
    %v60 = vld [vmem:[#allocation7 + $0x60] sm:$0xff]
    %v61 = vld [vmem:[#allocation7 + $0x68] sm:$0xff]
    %v62 = vld [vmem:[#allocation7 + $0x70] sm:$0xff]
    %v63 = vld [vmem:[#allocation7 + $0x78] sm:$0xff]
    %v64 = vld [vmem:[%s3] sm:$0x1]
    %v66 = vperm.slane %v64, 0
    %68 = vmatpush.msra.mxu0 %v63
    %69 = vmatpush.msra.mxu0 %v62
    %70 = vmatpush.msra.mxu0 %v61
    %71 = vmatpush.msra.mxu0 %v60
    %72 = vmatpush.msra.mxu0 %v59
    %73 = vmatpush.msra.mxu0 %v58
    %74 = vmatpush.msra.mxu0 %v57
    %75 = vmatpush.msra.mxu0 %v56
    %76 = vmatpush.msra.mxu0 %v55
    %77 = vmatpush.msra.mxu0 %v54
    %78 = vmatpush.msra.mxu0 %v53
    %79 = vmatpush.msra.mxu0 %v52
    %80 = vmatpush.msra.mxu0 %v51
    %81 = vmatpush.msra.mxu0 %v50
    %82 = vmatpush.msra.mxu0 %v49
    %83 = vmatpush.msra.mxu0 %v48
    %84 = vmatmul.f32.gmra.mxu0 %v47
    %v85 = vpop.f32.mrf.mxu0
    %v86 = vadd.f32 %v66, %v85
    %87 = vdwg.mxu0
    %v88 = vmax.f32 %v86, 0.0
    %89 = vst [vmem:[#allocation9] sm:$0xff] %v88
    // Predicated region
    $region22: #{tpu_custom_call.1} parent=1 // pred_check
      _
    $region23: #{tpu_custom_call.1} parent=1 // pred_check_branch
      %91 = sbr.rel (0) target = $region25
    $region24: #{tpu_custom_call.1} parent=1 // pred_region
      %93 = vsyncadd [#allocation6], 0
      %s95 = sshll.u32 [#allocation9], 4
      %s96 = int_to_ptr.vmem [resolvable:$true] %s95
      %s97 = sshll.u32 %s4, 4
      %s98 = int_to_ptr.hbm [resolvable:$true] %s97
      %100 = dma.vmem_to_hbm [thread:$0]  %s96, 128, %s98, [#allocation6]
    $region25: #{tpu_custom_call.1} parent=1 // pred_fallthru
      _
    // Predicated region
    $region26: #{tpu_custom_call.1} parent=1 // pred_check
      _
    $region27: #{tpu_custom_call.1} parent=1 // pred_check_branch
      %102 = sbr.rel (0) target = $region29
    $region28: #{tpu_custom_call.1} parent=1 // pred_region
      %104 = dma.done [#allocation6], 128
    $region29: #{tpu_custom_call.1} parent=1 // pred_fallthru
      _
    %105 = vsyncpa [#allocation5], 1
    %106 = vsyncpa [#allocation8], 1
    %107 = vsyncpa [#allocation6], 1

</llo_original>
